<compile_context>
chip_gen: v7x
topology: tpu7x:2x2x1
jax: 0.10.0
libtpu: 0.0.40
codegen_flags: <defaults>
</compile_context>

<pallas_src>
import functools

import jax
import jax.numpy as jnp
from jax.experimental import pallas as pl
from jax.experimental.pallas import tpu as pltpu


def _round_up(x, m):
    return ((x + m - 1) // m) * m


def _sublane_multiple(dtype):
    # rows packed per sublane tile: 8 for 4-byte, 16 for 2-byte, 32 for 1-byte dtypes
    return max(8, 32 // jnp.dtype(dtype).itemsize)


def _vmem_capacity_bytes():
    try:
        info = pltpu.get_tpu_info()
        cap = getattr(info, "vmem_capacity_bytes", None)
        if cap:
            return int(cap)
    except Exception:
        pass
    return 64 * 2 ** 20          # conservative fallback (v7x-sized VMEM)


def _candidate_batch_tiles(n, requested):
    if requested is not None:
        if n % requested:
            raise ValueError(f"batch_tile={requested} must divide N={n}")
        return [requested]
    return [d for d in range(1, n + 1) if n % d == 0]


def _candidate_time_tiles(L, sub, requested):
    if requested is not None:
        if L % requested:
            raise ValueError(f"time_tile={requested} must divide L={L}")
        return [requested]
    cands = [d for d in range(sub, min(L, 4096) + 1, sub) if L % d == 0]
    if L <= 4096 and L not in cands:
        cands.append(L)
    if not cands:
        cands = [L]
    return sorted(set(cands))


def _pick_tiles(N, L, sub, budget, footprint, batch_tile, time_tile):
    nbs = _candidate_batch_tiles(N, batch_tile)
    tls = _candidate_time_tiles(L, sub, time_tile)
    combos = [(nb, tl) for nb in nbs for tl in tls]
    fitting = [c for c in combos if footprint(*c) <= budget]
    if fitting:
        # prefer >= 2 batch grid steps (megacore on v7x), then maximize rows per step,
        # then prefer larger time tiles (fewer sequential halo-carry steps)
        mc = [c for c in fitting if N // c[0] >= 2]
        pool = mc if mc else fitting
        return max(pool, key=lambda c: (c[0] * c[1], c[1]))
    return min(combos, key=lambda c: footprint(*c))


def _temporal_block_kernel(*refs, k_taps, dilation, padding, pad_off, use_downsample):
    """One grid step = (one batch tile, one time tile).

    x_ref  : (NB, TL, Cin)          input tile (compute dtype, lane-padded)
    w1_ref : (K*Cin, Cout)          conv1 taps, flattened for one contraction
    w2_ref : (K*Cout, Cout)         conv2 taps, flattened
    wd_ref : (Cin, Cout)            1x1 downsample (only when use_downsample)
    b*_ref : (1, Cout) float32      biases
    out_ref: (NB, TL, Cout)
    xs_ref : (NB, pad_off+TL, Cin)  carried causally-padded input window (scratch)
    hs_ref : (NB, pad_off+TL, Cout) carried causally-padded hidden window (scratch)
    """
    if use_downsample:
        (x_ref, w1_ref, b1_ref, w2_ref, b2_ref, wd_ref, bd_ref,
         out_ref, xs_ref, hs_ref) = refs
    else:
        x_ref, w1_ref, b1_ref, w2_ref, b2_ref, out_ref, xs_ref, hs_ref = refs
        wd_ref = bd_ref = None

    NB, TL, Cin = x_ref.shape
    Cout = out_ref.shape[2]
    K = k_taps
    cdt = xs_ref.dtype
    rows = NB * TL
    base = pad_off - padding
    t = pl.program_id(1)

    if padding > 0:
        # Causal zeros at the start of each sequence.  Rows [pad_off:) are fully
        # overwritten every step, so only the halo region is ever (re)zeroed.
        @pl.when(t == 0)
        def _():
            xs_ref[:, pl.ds(0, pad_off), :] = jnp.zeros((NB, pad_off, Cin), cdt)
            hs_ref[:, pl.ds(0, pad_off), :] = jnp.zeros((NB, pad_off, Cout), cdt)

    # Place the current tile behind the carried halo (sublane-aligned slot).
    xs_ref[:, pl.ds(pad_off, TL), :] = x_ref[...].astype(cdt)

    def causal_taps(src_ref, C):
        taps = [src_ref[:, pl.ds(base + k * dilation, TL), :].reshape(rows, C)
                for k in range(K)]
        return taps[0] if K == 1 else jnp.concatenate(taps, axis=-1)

    # ---- conv1 (causal dilated, all K taps in one MXU matmul) + bias + ReLU ----
    # dropout1 == identity in eval mode
    h = jnp.dot(causal_taps(xs_ref, Cin), w1_ref[...],
                preferred_element_type=jnp.float32) + b1_ref[...]
    h = jnp.maximum(h, 0.0)
    hs_ref[:, pl.ds(pad_off, TL), :] = h.reshape(NB, TL, Cout).astype(cdt)

    # ---- conv2 (causal dilated) + bias + ReLU  [dropout2 == identity] ----
    o = jnp.dot(causal_taps(hs_ref, Cout), w2_ref[...],
                preferred_element_type=jnp.float32) + b2_ref[...]
    o = jnp.maximum(o, 0.0)

    # ---- residual (1x1 downsample when Cin != Cout, identity otherwise) + ReLU ----
    x2 = x_ref[...].reshape(rows, Cin)
    if use_downsample:
        res = jnp.dot(x2, wd_ref[...], preferred_element_type=jnp.float32) + bd_ref[...]
    else:
        res = x2.astype(jnp.float32)
    out_ref[...] = jnp.maximum(o + res, 0.0).reshape(NB, TL, Cout).astype(out_ref.dtype)

    if padding > 0:
        # Carry the last `padding` rows of this window into the halo slot for t+1.
        @pl.when(t + 1 < pl.num_programs(1))
        def _():
            # Load fully before storing: the regions overlap whenever padding > TL.
            x_carry = xs_ref[:, pl.ds(base + TL, padding), :]
            h_carry = hs_ref[:, pl.ds(base + TL, padding), :]
            xs_ref[:, pl.ds(base, padding), :] = x_carry
            hs_ref[:, pl.ds(base, padding), :] = h_carry


def temporal_block(x, params, *, kernel_size, dilation, padding,
                   batch_tile=None, time_tile=None, compute_dtype=jnp.bfloat16,
                   use_downsample=None, pad_channels=True, channels_last_io=False,
                   out_dtype=None):
    """TemporalBlock forward (stride=1, eval mode, weight_norm folded into weights).

    x: (N, C_in, L) in PyTorch NCL layout, or (N, L, C_in) if channels_last_io=True
       (use channels_last_io when stacking blocks to avoid per-block HBM transposes).
    params: {"w1": (K, Cin, Cout), "b1": (1, Cout), "w2": (K, Cout, Cout),
             "b2": (1, Cout), optionally "wd": (Cin, Cout), "bd": (1, Cout)}.
    """
    if channels_last_io:
        N, L, Cin = x.shape
        x_nlc = x
    else:
        N, Cin, L = x.shape
        x_nlc = jnp.transpose(x, (0, 2, 1))
    K = kernel_size
    Cout = params["w1"].shape[2]
    if padding != (K - 1) * dilation:
        raise ValueError("TemporalBlock requires padding == (kernel_size - 1) * dilation")
    if use_downsample is None:
        use_downsample = Cin != Cout          # mirrors the PyTorch module
    out_dtype = x.dtype if out_dtype is None else out_dtype

    sub = _sublane_multiple(compute_dtype)
    pad_off = 0 if padding == 0 else _round_up(padding, sub)
    Cin_p = _round_up(Cin, 128) if pad_channels else Cin
    Cout_p = _round_up(Cout, 128) if pad_channels else Cout

    cb = jnp.dtype(compute_dtype).itemsize
    ob = jnp.dtype(out_dtype).itemsize

    # ---- footprint- and chip-aware tile / VMEM-limit selection ----
    w_bytes = (2 * (K * Cin_p * Cout_p + K * Cout_p * Cout_p
                    + (Cin_p * Cout_p if use_downsample else 0)) * cb
               + 6 * Cout_p * 4)

    def footprint(nb, tl):
        rows = nb * tl
        blocks = 2 * rows * Cin_p * cb + 2 * rows * Cout_p * ob        # dbl-buffered x/out
        scratch = nb * (pad_off + tl) * (Cin_p + Cout_p) * cb          # halo windows
        work = rows * (K * (Cin_p + Cout_p) * cb + 3 * Cout_p * 4)     # im2col + f32 temps
        return blocks + scratch + work + w_bytes

    vmem_phys = _vmem_capacity_bytes()
    vmem_cap = min(int(vmem_phys * 0.82), vmem_phys - 8 * 2 ** 20)      # Mosaic headroom
    budget = vmem_cap - 4 * 2 ** 20
    NB, TL = _pick_tiles(N, L, sub, budget, footprint, batch_tile, time_tile)
    if TL % sub and TL != L and batch_tile is None:
        NB = 1           # keep the (NB,TL,C)->(NB*TL,C) reshape layout-free
    vmem_limit = int(vmem_cap)

    # ---- host-side layout: (N,L,C) with channels lane-padded; weights flattened ----
    x_in = x_nlc.astype(compute_dtype)
    if Cin_p != Cin:
        x_in = jnp.pad(x_in, ((0, 0), (0, 0), (0, Cin_p - Cin)))

    def pad2(a, r, c):
        return jnp.pad(a, ((0, r - a.shape[0]), (0, c - a.shape[1])))

    w1 = jnp.pad(params["w1"], ((0, 0), (0, Cin_p - Cin), (0, Cout_p - Cout)))
    w1 = w1.reshape(K * Cin_p, Cout_p).astype(compute_dtype)
    w2 = jnp.pad(params["w2"], ((0, 0), (0, Cout_p - Cout), (0, Cout_p - Cout)))
    w2 = w2.reshape(K * Cout_p, Cout_p).astype(compute_dtype)
    b1 = pad2(params["b1"].reshape(1, Cout).astype(jnp.float32), 1, Cout_p)
    b2 = pad2(params["b2"].reshape(1, Cout).astype(jnp.float32), 1, Cout_p)

    inputs = [x_in, w1, b1, w2, b2]
    in_specs = [
        pl.BlockSpec((NB, TL, Cin_p), lambda b, t: (b, t, 0)),          # x (single stream)
        pl.BlockSpec((K * Cin_p, Cout_p), lambda b, t: (0, 0)),         # w1 (flattened taps)
        pl.BlockSpec((1, Cout_p), lambda b, t: (0, 0)),                 # b1
        pl.BlockSpec((K * Cout_p, Cout_p), lambda b, t: (0, 0)),        # w2
        pl.BlockSpec((1, Cout_p), lambda b, t: (0, 0)),                 # b2
    ]
    if use_downsample:
        wd = pad2(params["wd"], Cin_p, Cout_p).astype(compute_dtype)
        bd = pad2(params["bd"].reshape(1, Cout).astype(jnp.float32), 1, Cout_p)
        inputs += [wd, bd]
        in_specs += [pl.BlockSpec((Cin_p, Cout_p), lambda b, t: (0, 0)),
                     pl.BlockSpec((1, Cout_p), lambda b, t: (0, 0))]

    kernel = functools.partial(_temporal_block_kernel, k_taps=K, dilation=dilation,
                               padding=padding, pad_off=pad_off,
                               use_downsample=use_downsample)

    out = pl.pallas_call(
        kernel,
        out_shape=jax.ShapeDtypeStruct((N, L, Cout_p), out_dtype),
        grid_spec=pltpu.PrefetchScalarGridSpec(
            num_scalar_prefetch=0,
            grid=(N // NB, L // TL),
            in_specs=in_specs,
            out_specs=pl.BlockSpec((NB, TL, Cout_p), lambda b, t: (b, t, 0)),
            scratch_shapes=[
                pltpu.VMEM((NB, pad_off + TL, Cin_p), compute_dtype),
                pltpu.VMEM((NB, pad_off + TL, Cout_p), compute_dtype),
            ],
        ),
        compiler_params=pltpu.CompilerParams(
            dimension_semantics=("parallel", "arbitrary"),
            vmem_limit_bytes=vmem_limit,
        ),
    )(*inputs)

    if Cout_p != Cout:
        out = out[:, :, :Cout]
    return out if channels_last_io else jnp.transpose(out, (0, 2, 1))


def temporal_block_reference(x_ncl, params, *, kernel_size, dilation, padding,
                             use_downsample=True):
    """Pure-JAX f32 reference with identical semantics (for verification)."""
    x = jnp.transpose(x_ncl, (0, 2, 1)).astype(jnp.float32)
    L = x.shape[1]
    xpad = jnp.pad(x, ((0, 0), (padding, 0), (0, 0)))
    h = sum(jnp.einsum("nlc,co->nlo", xpad[:, k * dilation:k * dilation + L, :],
                       params["w1"][k]) for k in range(kernel_size)) + params["b1"]
    h = jnp.maximum(h, 0.0)
    hpad = jnp.pad(h, ((0, 0), (padding, 0), (0, 0)))
    o = sum(jnp.einsum("nlc,co->nlo", hpad[:, k * dilation:k * dilation + L, :],
                       params["w2"][k]) for k in range(kernel_size)) + params["b2"]
    o = jnp.maximum(o, 0.0)
    if use_downsample:
        res = jnp.einsum("nlc,co->nlo", x, params["wd"]) + params["bd"]
    else:
        res = x
    return jnp.transpose(jnp.maximum(o + res, 0.0), (0, 2, 1))


if __name__ == "__main__":
    # TODO(synk): train-mode dropout masks and norm_strategy='batchnorm' (running-stat
    # BatchNorm1d) are not implemented; this is the eval-mode 'weight' path with the
    # weight_norm reparameterization folded into effective weights.

    def make_params(key, K, Cin, Cout, with_downsample=True):
        keys = jax.random.split(key, 6)
        p = {
            "w1": 0.01 * jax.random.normal(keys[0], (K, Cin, Cout), jnp.float32),
            "b1": 0.01 * jax.random.normal(keys[1], (1, Cout), jnp.float32),
            "w2": 0.01 * jax.random.normal(keys[2], (K, Cout, Cout), jnp.float32),
            "b2": 0.01 * jax.random.normal(keys[3], (1, Cout), jnp.float32),
        }
        if with_downsample:
            p["wd"] = 0.01 * jax.random.normal(keys[4], (Cin, Cout), jnp.float32)
            p["bd"] = 0.01 * jax.random.normal(keys[5], (1, Cout), jnp.float32)
        return p

    root = jax.random.PRNGKey(0)
    kA, kB, kC = jax.random.split(root, 3)

    # ---- A: tiny block, exact f32 check (single time tile, 1x1 downsample) ----
    N, Cin, Cout, L, K, dil = 2, 4, 8, 16, 3, 2
    pad = (K - 1) * dil
    kx, kp = jax.random.split(kA)
    params = make_params(kp, K, Cin, Cout)
    x = jax.random.normal(kx, (N, Cin, L), jnp.float32)
    out = jax.block_until_ready(
        temporal_block(x, params, kernel_size=K, dilation=dil, padding=pad,
                       compute_dtype=jnp.float32))
    ref = temporal_block_reference(x, params, kernel_size=K, dilation=dil, padding=pad)
    assert out.shape == (N, Cout, L), out.shape
    assert jnp.allclose(out, ref, atol=1e-5, rtol=1e-5), "A: f32 mismatch vs reference"

    # ---- B: bf16 MXU path; batch tiling, time tiling and halo carry exercised ----
    N, Cin, Cout, L, K, dil = 4, 8, 16, 64, 3, 4
    pad = (K - 1) * dil
    kx, kp = jax.random.split(kB)
    params = make_params(kp, K, Cin, Cout)
    x = jax.random.normal(kx, (N, Cin, L), jnp.float32)
    out = jax.block_until_ready(
        temporal_block(x, params, kernel_size=K, dilation=dil, padding=pad,
                       batch_tile=2, time_tile=32, compute_dtype=jnp.bfloat16))
    ref = temporal_block_reference(x, params, kernel_size=K, dilation=dil, padding=pad)
    assert out.shape == (N, Cout, L), out.shape
    assert jnp.allclose(out, ref, atol=3e-3, rtol=5e-2), "B: bf16 mismatch vs reference"

    # ---- C: identity residual (Cin == Cout, no downsample) + padding > time_tile, so
    #         the self-overlapping halo-carry copy is exercised; exact f32 check ----
    N, Cin, Cout, L, K, dil = 2, 8, 8, 64, 3, 16
    pad = (K - 1) * dil                      # 32 > time_tile = 16
    kx, kp = jax.random.split(kC)
    params = make_params(kp, K, Cin, Cout, with_downsample=False)
    x = jax.random.normal(kx, (N, Cin, L), jnp.float32)
    out = jax.block_until_ready(
        temporal_block(x, params, kernel_size=K, dilation=dil, padding=pad,
                       time_tile=16, compute_dtype=jnp.float32))
    ref = temporal_block_reference(x, params, kernel_size=K, dilation=dil, padding=pad,
                                   use_downsample=False)
    assert out.shape == (N, Cout, L), out.shape
    assert jnp.allclose(out, ref, atol=1e-5, rtol=1e-5), "C: overlap-carry mismatch"

    print("KERNEL_OK")
</pallas_src>

<mosaic_0001>
module attributes {stable_mosaic.version = 11 : i64} {
  func.func @_temporal_block_kernel(%arg0: i32, %arg1: i32, %arg2: memref<1x16x128xf32, #tpu.memory_space<vmem>>, %arg3: memref<384x128xf32, #tpu.memory_space<vmem>>, %arg4: memref<1x128xf32, #tpu.memory_space<vmem>>, %arg5: memref<384x128xf32, #tpu.memory_space<vmem>>, %arg6: memref<1x128xf32, #tpu.memory_space<vmem>>, %arg7: memref<128x128xf32, #tpu.memory_space<vmem>>, %arg8: memref<1x128xf32, #tpu.memory_space<vmem>>, %arg9: memref<1x16x128xf32, #tpu.memory_space<vmem>>, %arg10: memref<1x24x128xf32, #tpu.memory_space<vmem>>, %arg11: memref<1x24x128xf32, #tpu.memory_space<vmem>>) attributes {dimension_semantics = [#tpu.dimension_semantics<parallel>, #tpu.dimension_semantics<arbitrary>], iteration_bounds = array<i64: 2, 1>, scalar_prefetch = 0 : i64, scratch_operands = 2 : i64, tpu.core_type = #tpu.core_type<tc>, window_params = [{transform_indices = @transform_0, window_bounds = array<i64: 1, 16, 128>}, {pipeline_mode = #tpu.pipeline_mode<synchronous>, transform_indices = @transform_1, window_bounds = array<i64: 384, 128>}, {pipeline_mode = #tpu.pipeline_mode<synchronous>, transform_indices = @transform_2, window_bounds = array<i64: 1, 128>}, {pipeline_mode = #tpu.pipeline_mode<synchronous>, transform_indices = @transform_3, window_bounds = array<i64: 384, 128>}, {pipeline_mode = #tpu.pipeline_mode<synchronous>, transform_indices = @transform_4, window_bounds = array<i64: 1, 128>}, {pipeline_mode = #tpu.pipeline_mode<synchronous>, transform_indices = @transform_5, window_bounds = array<i64: 128, 128>}, {pipeline_mode = #tpu.pipeline_mode<synchronous>, transform_indices = @transform_6, window_bounds = array<i64: 1, 128>}, {transform_indices = @transform_7, window_bounds = array<i64: 1, 16, 128>}]} {
    %c0_i32 = arith.constant 0 : i32
    %0 = arith.cmpi eq, %arg1, %c0_i32 : i32
    %1 = arith.extui %0 : i1 to i32
    %c0_i32_0 = arith.constant 0 : i32
    %2 = arith.cmpi ne, %1, %c0_i32_0 : i32
    scf.if %2 {
      %cst_49 = arith.constant 0.000000e+00 : f32
      %51 = vector.broadcast %cst_49 : f32 to vector<1x8x128xf32>
      %c0_50 = arith.constant 0 : index
      %c0_51 = arith.constant 0 : index
      %c0_52 = arith.constant 0 : index
      %52 = vector.load %arg10[%c0_50, %c0_51, %c0_52] : memref<1x24x128xf32, #tpu.memory_space<vmem>>, vector<1x8x128xf32>
      tpu.vector_store %arg10[%c0_50, %c0_51, %c0_52], %51 {strides = array<i32>} : memref<1x24x128xf32, #tpu.memory_space<vmem>>, vector<1x8x128xf32>,
      %cst_53 = arith.constant 0.000000e+00 : f32
      %53 = vector.broadcast %cst_53 : f32 to vector<1x8x128xf32>
      %c0_54 = arith.constant 0 : index
      %c0_55 = arith.constant 0 : index
      %c0_56 = arith.constant 0 : index
      %54 = vector.load %arg11[%c0_54, %c0_55, %c0_56] : memref<1x24x128xf32, #tpu.memory_space<vmem>>, vector<1x8x128xf32>
      tpu.vector_store %arg11[%c0_54, %c0_55, %c0_56], %53 {strides = array<i32>} : memref<1x24x128xf32, #tpu.memory_space<vmem>>, vector<1x8x128xf32>,
    } else {
    }
    %c0 = arith.constant 0 : index
    %c0_1 = arith.constant 0 : index
    %c0_2 = arith.constant 0 : index
    %3 = vector.load %arg2[%c0, %c0_1, %c0_2] : memref<1x16x128xf32, #tpu.memory_space<vmem>>, vector<1x16x128xf32>
    %c0_3 = arith.constant 0 : index
    %c8 = arith.constant 8 : index
    %c0_4 = arith.constant 0 : index
    %4 = vector.load %arg10[%c0_3, %c8, %c0_4] : memref<1x24x128xf32, #tpu.memory_space<vmem>>, vector<1x16x128xf32>
    tpu.vector_store %arg10[%c0_3, %c8, %c0_4], %3 {strides = array<i32>} : memref<1x24x128xf32, #tpu.memory_space<vmem>>, vector<1x16x128xf32>,
    %c0_5 = arith.constant 0 : index
    %c4 = arith.constant 4 : index
    %c0_6 = arith.constant 0 : index
    %5 = vector.load %arg10[%c0_5, %c4, %c0_6] : memref<1x24x128xf32, #tpu.memory_space<vmem>>, vector<1x16x128xf32>
    %6 = vector.shape_cast %5 : vector<1x16x128xf32> to vector<16x128xf32>
    %c0_7 = arith.constant 0 : index
    %c6 = arith.constant 6 : index
    %c0_8 = arith.constant 0 : index
    %7 = vector.load %arg10[%c0_7, %c6, %c0_8] : memref<1x24x128xf32, #tpu.memory_space<vmem>>, vector<1x16x128xf32>
    %8 = vector.shape_cast %7 : vector<1x16x128xf32> to vector<16x128xf32>
    %c0_9 = arith.constant 0 : index
    %c8_10 = arith.constant 8 : index
    %c0_11 = arith.constant 0 : index
    %9 = vector.load %arg10[%c0_9, %c8_10, %c0_11] : memref<1x24x128xf32, #tpu.memory_space<vmem>>, vector<1x16x128xf32>
    %10 = vector.shape_cast %9 : vector<1x16x128xf32> to vector<16x128xf32>
    %11 = tpu.concatenate %6, %8, %10 in 1 : vector<16x128xf32>, vector<16x128xf32>, vector<16x128xf32> -> vector<16x384xf32>
    %c0_12 = arith.constant 0 : index
    %c0_13 = arith.constant 0 : index
    %12 = vector.load %arg3[%c0_12, %c0_13] : memref<384x128xf32, #tpu.memory_space<vmem>>, vector<384x128xf32>
    %cst = arith.constant dense<0.000000e+00> : vector<16x128xf32>
    %13 = tpu.matmul %11, %12, %cst {dimension_numbers = #tpu.dot_dimension_numbers<[1], [0], [0], [1], [0, 0, 1, 1], [], []>} : vector<16x384xf32>, vector<384x128xf32>, vector<16x128xf32> -> vector<16x128xf32>
    %c0_14 = arith.constant 0 : index
    %c0_15 = arith.constant 0 : index
    %14 = vector.load %arg4[%c0_14, %c0_15] : memref<1x128xf32, #tpu.memory_space<vmem>>, vector<1x128xf32>
    %15 = vector.broadcast %14 : vector<1x128xf32> to vector<16x128xf32>
    %16 = arith.addf %13, %15 : vector<16x128xf32>
    %cst_16 = arith.constant 0.000000e+00 : f32
    %17 = vector.broadcast %cst_16 : f32 to vector<16x128xf32>
    %18 = arith.maximumf %16, %17 : vector<16x128xf32>
    %19 = vector.shape_cast %18 : vector<16x128xf32> to vector<1x16x128xf32>
    %c0_17 = arith.constant 0 : index
    %c8_18 = arith.constant 8 : index
    %c0_19 = arith.constant 0 : index
    %20 = vector.load %arg11[%c0_17, %c8_18, %c0_19] : memref<1x24x128xf32, #tpu.memory_space<vmem>>, vector<1x16x128xf32>
    tpu.vector_store %arg11[%c0_17, %c8_18, %c0_19], %19 {strides = array<i32>} : memref<1x24x128xf32, #tpu.memory_space<vmem>>, vector<1x16x128xf32>,
    %c0_20 = arith.constant 0 : index
    %c4_21 = arith.constant 4 : index
    %c0_22 = arith.constant 0 : index
    %21 = vector.load %arg11[%c0_20, %c4_21, %c0_22] : memref<1x24x128xf32, #tpu.memory_space<vmem>>, vector<1x16x128xf32>
    %22 = vector.shape_cast %21 : vector<1x16x128xf32> to vector<16x128xf32>
    %c0_23 = arith.constant 0 : index
    %c6_24 = arith.constant 6 : index
    %c0_25 = arith.constant 0 : index
    %23 = vector.load %arg11[%c0_23, %c6_24, %c0_25] : memref<1x24x128xf32, #tpu.memory_space<vmem>>, vector<1x16x128xf32>
    %24 = vector.shape_cast %23 : vector<1x16x128xf32> to vector<16x128xf32>
    %c0_26 = arith.constant 0 : index
    %c8_27 = arith.constant 8 : index
    %c0_28 = arith.constant 0 : index
    %25 = vector.load %arg11[%c0_26, %c8_27, %c0_28] : memref<1x24x128xf32, #tpu.memory_space<vmem>>, vector<1x16x128xf32>
    %26 = vector.shape_cast %25 : vector<1x16x128xf32> to vector<16x128xf32>
    %27 = tpu.concatenate %22, %24, %26 in 1 : vector<16x128xf32>, vector<16x128xf32>, vector<16x128xf32> -> vector<16x384xf32>
    %c0_29 = arith.constant 0 : index
    %c0_30 = arith.constant 0 : index
    %28 = vector.load %arg5[%c0_29, %c0_30] : memref<384x128xf32, #tpu.memory_space<vmem>>, vector<384x128xf32>
    %cst_31 = arith.constant dense<0.000000e+00> : vector<16x128xf32>
    %29 = tpu.matmul %27, %28, %cst_31 {dimension_numbers = #tpu.dot_dimension_numbers<[1], [0], [0], [1], [0, 0, 1, 1], [], []>} : vector<16x384xf32>, vector<384x128xf32>, vector<16x128xf32> -> vector<16x128xf32>
    %c0_32 = arith.constant 0 : index
    %c0_33 = arith.constant 0 : index
    %30 = vector.load %arg6[%c0_32, %c0_33] : memref<1x128xf32, #tpu.memory_space<vmem>>, vector<1x128xf32>
    %31 = vector.broadcast %30 : vector<1x128xf32> to vector<16x128xf32>
    %32 = arith.addf %29, %31 : vector<16x128xf32>
    %cst_34 = arith.constant 0.000000e+00 : f32
    %33 = vector.broadcast %cst_34 : f32 to vector<16x128xf32>
    %34 = arith.maximumf %32, %33 : vector<16x128xf32>
    %c0_35 = arith.constant 0 : index
    %c0_36 = arith.constant 0 : index
    %c0_37 = arith.constant 0 : index
    %35 = vector.load %arg2[%c0_35, %c0_36, %c0_37] : memref<1x16x128xf32, #tpu.memory_space<vmem>>, vector<1x16x128xf32>
    %36 = vector.shape_cast %35 : vector<1x16x128xf32> to vector<16x128xf32>
    %c0_38 = arith.constant 0 : index
    %c0_39 = arith.constant 0 : index
    %37 = vector.load %arg7[%c0_38, %c0_39] : memref<128x128xf32, #tpu.memory_space<vmem>>, vector<128x128xf32>
    %cst_40 = arith.constant dense<0.000000e+00> : vector<16x128xf32>
    %38 = tpu.matmul %36, %37, %cst_40 {dimension_numbers = #tpu.dot_dimension_numbers<[1], [0], [0], [1], [0, 0, 1, 1], [], []>} : vector<16x128xf32>, vector<128x128xf32>, vector<16x128xf32> -> vector<16x128xf32>
    %c0_41 = arith.constant 0 : index
    %c0_42 = arith.constant 0 : index
    %39 = vector.load %arg8[%c0_41, %c0_42] : memref<1x128xf32, #tpu.memory_space<vmem>>, vector<1x128xf32>
    %40 = vector.broadcast %39 : vector<1x128xf32> to vector<16x128xf32>
    %41 = arith.addf %38, %40 : vector<16x128xf32>
    %42 = arith.addf %34, %41 : vector<16x128xf32>
    %cst_43 = arith.constant 0.000000e+00 : f32
    %43 = vector.broadcast %cst_43 : f32 to vector<16x128xf32>
    %44 = arith.maximumf %42, %43 : vector<16x128xf32>
    %45 = vector.shape_cast %44 : vector<16x128xf32> to vector<1x16x128xf32>
    %c0_44 = arith.constant 0 : index
    %c0_45 = arith.constant 0 : index
    %c0_46 = arith.constant 0 : index
    %46 = vector.load %arg9[%c0_44, %c0_45, %c0_46] : memref<1x16x128xf32, #tpu.memory_space<vmem>>, vector<1x16x128xf32>
    tpu.vector_store %arg9[%c0_44, %c0_45, %c0_46], %45 {strides = array<i32>} : memref<1x16x128xf32, #tpu.memory_space<vmem>>, vector<1x16x128xf32>,
    %c1_i32 = arith.constant 1 : i32
    %47 = arith.addi %arg1, %c1_i32 : i32
    %c1_i32_47 = arith.constant 1 : i32
    %48 = arith.cmpi slt, %47, %c1_i32_47 : i32
    %49 = arith.extui %48 : i1 to i32
    %c0_i32_48 = arith.constant 0 : i32
    %50 = arith.cmpi ne, %49, %c0_i32_48 : i32
    scf.if %50 {
      %c0_49 = arith.constant 0 : index
      %c20 = arith.constant 20 : index
      %c0_50 = arith.constant 0 : index
      %51 = vector.load %arg10[%c0_49, %c20, %c0_50] : memref<1x24x128xf32, #tpu.memory_space<vmem>>, vector<1x4x128xf32>
      %c0_51 = arith.constant 0 : index
      %c20_52 = arith.constant 20 : index
      %c0_53 = arith.constant 0 : index
      %52 = vector.load %arg11[%c0_51, %c20_52, %c0_53] : memref<1x24x128xf32, #tpu.memory_space<vmem>>, vector<1x4x128xf32>
      %c0_54 = arith.constant 0 : index
      %c4_55 = arith.constant 4 : index
      %c0_56 = arith.constant 0 : index
      %53 = vector.load %arg10[%c0_54, %c4_55, %c0_56] : memref<1x24x128xf32, #tpu.memory_space<vmem>>, vector<1x4x128xf32>
      tpu.vector_store %arg10[%c0_54, %c4_55, %c0_56], %51 {strides = array<i32>} : memref<1x24x128xf32, #tpu.memory_space<vmem>>, vector<1x4x128xf32>,
      %c0_57 = arith.constant 0 : index
      %c4_58 = arith.constant 4 : index
      %c0_59 = arith.constant 0 : index
      %54 = vector.load %arg11[%c0_57, %c4_58, %c0_59] : memref<1x24x128xf32, #tpu.memory_space<vmem>>, vector<1x4x128xf32>
      tpu.vector_store %arg11[%c0_57, %c4_58, %c0_59], %52 {strides = array<i32>} : memref<1x24x128xf32, #tpu.memory_space<vmem>>, vector<1x4x128xf32>,
    } else {
    }
    return
  }
  func.func @transform_0(%arg0: i32, %arg1: i32) -> (i32, i32, i32) {
    %c0_i32 = arith.constant 0 : i32
    %c0_i32_0 = arith.constant 0 : i32
    return %arg0, %arg1, %c0_i32 : i32, i32, i32
  }
  func.func @transform_1(%arg0: i32, %arg1: i32) -> (i32, i32) {
    %c0_i32 = arith.constant 0 : i32
    %c0_i32_0 = arith.constant 0 : i32
    %c0_i32_1 = arith.constant 0 : i32
    return %c0_i32, %c0_i32_0 : i32, i32
  }
  func.func @transform_2(%arg0: i32, %arg1: i32) -> (i32, i32) {
    %c0_i32 = arith.constant 0 : i32
    %c0_i32_0 = arith.constant 0 : i32
    %c0_i32_1 = arith.constant 0 : i32
    return %c0_i32, %c0_i32_0 : i32, i32
  }
  func.func @transform_3(%arg0: i32, %arg1: i32) -> (i32, i32) {
    %c0_i32 = arith.constant 0 : i32
    %c0_i32_0 = arith.constant 0 : i32
    %c0_i32_1 = arith.constant 0 : i32
    return %c0_i32, %c0_i32_0 : i32, i32
  }
  func.func @transform_4(%arg0: i32, %arg1: i32) -> (i32, i32) {
    %c0_i32 = arith.constant 0 : i32
    %c0_i32_0 = arith.constant 0 : i32
    %c0_i32_1 = arith.constant 0 : i32
    return %c0_i32, %c0_i32_0 : i32, i32
  }
  func.func @transform_5(%arg0: i32, %arg1: i32) -> (i32, i32) {
    %c0_i32 = arith.constant 0 : i32
    %c0_i32_0 = arith.constant 0 : i32
    %c0_i32_1 = arith.constant 0 : i32
    return %c0_i32, %c0_i32_0 : i32, i32
  }
  func.func @transform_6(%arg0: i32, %arg1: i32) -> (i32, i32) {
    %c0_i32 = arith.constant 0 : i32
    %c0_i32_0 = arith.constant 0 : i32
    %c0_i32_1 = arith.constant 0 : i32
    return %c0_i32, %c0_i32_0 : i32, i32
  }
  func.func @transform_7(%arg0: i32, %arg1: i32) -> (i32, i32, i32) {
    %c0_i32 = arith.constant 0 : i32
    %c0_i32_0 = arith.constant 0 : i32
    return %arg0, %arg1, %c0_i32 : i32, i32, i32
  }
}

</mosaic_0001>

<llo_original>
// kernel: tpu_custom_call.1
$region0: #{tpu_custom_call.1}
  #allocation0 [shape = 'u32[]', space=smem, size = 0x4, offset = 0x4, fixed_abs, tag = 'smem constant byte address 0x4 - core index']
  #allocation1 [shape = 'u32[144,128]{1,0:T(1,128)}', space=vmem, size = 0x12000, scoped, tag = 'internal scratch']
  #allocation2 [shape = 'f32[1,24,128]{2,1,0:T(8,128)}', space=vmem, size = 0x3000, scoped, tag = 'scratch operand']
  #allocation3 [shape = 'f32[1,24,128]{2,1,0:T(8,128)}', space=vmem, size = 0x3000, scoped, tag = 'scratch operand']
  %s0 = inlined_call_operand.hbm [shape: f32[2,16,128], index: 0, kind: input, shape index: {}]
  %s1 = inlined_call_operand.hbm [shape: f32[384,128], index: 1, kind: input, shape index: {}]
  %s2 = inlined_call_operand.vmem [shape: f32[1,128], index: 2, kind: input, shape index: {}]
  %s3 = inlined_call_operand.hbm [shape: f32[384,128], index: 3, kind: input, shape index: {}]
  %s4 = inlined_call_operand.vmem [shape: f32[1,128], index: 4, kind: input, shape index: {}]
  %s5 = inlined_call_operand.hbm [shape: f32[128,128], index: 5, kind: input, shape index: {}]
  %s6 = inlined_call_operand.vmem [shape: f32[1,128], index: 6, kind: input, shape index: {}]
  %s7 = inlined_call_operand.hbm [shape: f32[2,16,128], index: 7, kind: output, shape index: {}]
  %s8 = sld [smem:[#allocation0]]
  $region85: #{tpu_custom_call.1} parent=0
    _
  %s10 = ssub.s32 1, %s8
  %s11 = scalar_select 0, %s10, %s8
  $region1: #{tpu_custom_call.1} parent=0
    #allocation4 [shape = 'u8[16384]{0}', space=vmem, size = 0x4000, scoped, tag = 'input window, operand 0']
    #allocation5 [shape = 's32[2]{0}', space=sflag, size = 0x8, scoped, tag = 'scoped memory for tpu_custom_call.1']
    #allocation6 [shape = 's32[2]{0}', space=sflag, size = 0x8, scoped, tag = 'scoped memory for tpu_custom_call.1']
    #allocation7 [shape = 'u8[196608]{0}', space=vmem, size = 0x30000, scoped, tag = 'input window, operand 1, single buffered']
    #allocation8 [shape = 's32[1]{0}', space=sflag, size = 0x4, scoped, tag = 'scoped memory for tpu_custom_call.1']
    #allocation9 [shape = 'u8[196608]{0}', space=vmem, size = 0x30000, scoped, tag = 'input window, operand 3, single buffered']
    #allocation10 [shape = 'u8[65536]{0}', space=vmem, size = 0x10000, scoped, tag = 'input window, operand 5, single buffered']
    #allocation11 [shape = 's32[1]{0}', space=sflag, size = 0x4, scoped, tag = 'scoped memory for tpu_custom_call.1']
    #allocation12 [shape = 'u8[16384]{0}', space=vmem, size = 0x4000, scoped, tag = 'output window, operand 0']
    %12 = vsyncpa [#allocation5], 0
    %s13 = scalar_lea.sflag [#allocation5], 1
    %14 = vsyncpa %s13, 0
    %15 = vsyncpa [#allocation8], 0
    %16 = vsyncpa [#allocation11], 0
    %17 = vsyncpa [#allocation6], 0
    %s18 = scalar_lea.sflag [#allocation6], 1
    %19 = vsyncpa %s18, 0
    loop: start=0, step=1, limit=4
    $region2: #{tpu_custom_call.1} parent=1 // loop_pre_header
      _
    $region3: #{tpu_custom_call.1} parent=1 // loop_header
      %s21 = sphi 0, %s25
      %p22 = scmp.ge.s32.totalorder %s21, 4
      %s28 = sphi 0, %s40
      %s29 = sphi 0, %s36
      %s30 = sphi 0, %s28
      %s31 = sphi 0, %s29
      %s32 = sphi 0, %s30
      %s33 = sphi 0, %s31
      %s45 = sphi 0, %s47
      %s48 = sphi 0, %s45
      %s49 = sphi 0, %s48
      %s65 = sphi 0, %s49
      %s69 = sphi 0, %s69
      %s71 = sphi 0, %s69
      %s72 = sphi 0, %s71
      %s86 = sphi 0, %s72
      %s90 = sphi 0, %s90
      %s92 = sphi 0, %s90
      %s93 = sphi 0, %s92
      %s107 = sphi 0, %s93
      %s111 = sphi 0, %s111
      %s113 = sphi 0, %s111
      %s114 = sphi 0, %s113
      %s128 = sphi 0, %s114
      %s132 = sphi 0, %s132
      %s134 = sphi 0, %s132
      %s135 = sphi 0, %s134
      %s149 = sphi 0, %s135
      %s153 = sphi 0, %s153
      %s155 = sphi 0, %s153
      %s156 = sphi 0, %s155
      %s170 = sphi 0, %s156
      %s174 = sphi 0, %s174
      %s176 = sphi 0, %s174
      %s177 = sphi 0, %s176
      %s191 = sphi 0, %s177
      %s199 = sphi 0, %s201
      %s202 = sphi 0, %s199
      %s203 = sphi 0, %s202
      %s219 = sphi 0, %s203
    $region4: #{tpu_custom_call.1} parent=1 // loop_header_branch
      %24 = sbr.rel (%p22) target = $region8
    $region5: #{tpu_custom_call.1} parent=1 // loop_body
      %s26 = ssub.s32 %s21, 1
      %s27 = ssub.s32 %s21, 2
      %s34 = sadd.s32 1, %s29
      %p35 = scmp.ge.s32.totalorder %s34, 1
      %s36 = scalar_select %p35, 0, %s34
      %s37 = sadd.s32 1, %s28
      %s38 = scalar_select %p35, %s37, %s28
      %p39 = scmp.ge.s32.totalorder %s38, 2
      %s40 = scalar_select %p39, 0, %s38
      %s41 = ssub.s32 %s28, %s40
      %s42 = ssub.s32 %s29, %s36
      %s43 = sor.u32 %s41, %s42
      %p44 = scmp.eq.s32.totalorder %s43, 0
      %s46 = sadd.s32 %s45, 1
      %s47 = scalar_select %p44, %s45, %s46
      %p50 = pneg %p44
      %p51 = scmp.eq.s32.totalorder %s21, 1
      %p52 = por %p50, %p51
      %p53 = scmp.ne.s32.totalorder %s45, %s48
      %p54 = scmp.eq.s32.totalorder %s21, 0
      %p55 = por %p53, %p54
      %p56 = scmp.ne.s32.totalorder %s45, %s48
      %p57 = scmp.eq.s32.totalorder %s26, 1
      %p58 = por %p56, %p57
      %p59 = scmp.ne.s32.totalorder %s48, %s49
      %p60 = scmp.eq.s32.totalorder %s26, 0
      %p61 = por %p59, %p60
      %p62 = scmp.ne.s32.totalorder %s48, %s49
      %p63 = scmp.eq.s32.totalorder %s27, 1
      %p64 = por %p62, %p63
      %p66 = scmp.ne.s32.totalorder %s49, %s65
      %p67 = scmp.eq.s32.totalorder %s27, 0
      %p68 = por %p66, %p67
      %s70 = sadd.s32 %s69, 1
      %p73 = scmp.eq.s32.totalorder %s21, 1
      %p74 = scmp.ne.s32.totalorder %s69, %s71
      %p75 = scmp.eq.s32.totalorder %s21, 0
      %p76 = por %p74, %p75
      %p77 = scmp.ne.s32.totalorder %s69, %s71
      %p78 = scmp.eq.s32.totalorder %s26, 1
      %p79 = por %p77, %p78
      %p80 = scmp.ne.s32.totalorder %s71, %s72
      %p81 = scmp.eq.s32.totalorder %s26, 0
      %p82 = por %p80, %p81
      %p83 = scmp.ne.s32.totalorder %s71, %s72
      %p84 = scmp.eq.s32.totalorder %s27, 1
      %p85 = por %p83, %p84
      %p87 = scmp.ne.s32.totalorder %s72, %s86
      %p88 = scmp.eq.s32.totalorder %s27, 0
      %p89 = por %p87, %p88
      %s91 = sadd.s32 %s90, 1
      %p94 = scmp.eq.s32.totalorder %s21, 1
      %p95 = scmp.ne.s32.totalorder %s90, %s92
      %p96 = scmp.eq.s32.totalorder %s21, 0
      %p97 = por %p95, %p96
      %p98 = scmp.ne.s32.totalorder %s90, %s92
      %p99 = scmp.eq.s32.totalorder %s26, 1
      %p100 = por %p98, %p99
      %p101 = scmp.ne.s32.totalorder %s92, %s93
      %p102 = scmp.eq.s32.totalorder %s26, 0
      %p103 = por %p101, %p102
      %p104 = scmp.ne.s32.totalorder %s92, %s93
      %p105 = scmp.eq.s32.totalorder %s27, 1
      %p106 = por %p104, %p105
      %p108 = scmp.ne.s32.totalorder %s93, %s107
      %p109 = scmp.eq.s32.totalorder %s27, 0
      %p110 = por %p108, %p109
      %s112 = sadd.s32 %s111, 1
      %p115 = scmp.eq.s32.totalorder %s21, 1
      %p116 = scmp.ne.s32.totalorder %s111, %s113
      %p117 = scmp.eq.s32.totalorder %s21, 0
      %p118 = por %p116, %p117
      %p119 = scmp.ne.s32.totalorder %s111, %s113
      %p120 = scmp.eq.s32.totalorder %s26, 1
      %p121 = por %p119, %p120
      %p122 = scmp.ne.s32.totalorder %s113, %s114
      %p123 = scmp.eq.s32.totalorder %s26, 0
      %p124 = por %p122, %p123
      %p125 = scmp.ne.s32.totalorder %s113, %s114
      %p126 = scmp.eq.s32.totalorder %s27, 1
      %p127 = por %p125, %p126
      %p129 = scmp.ne.s32.totalorder %s114, %s128
      %p130 = scmp.eq.s32.totalorder %s27, 0
      %p131 = por %p129, %p130
      %s133 = sadd.s32 %s132, 1
      %p136 = scmp.eq.s32.totalorder %s21, 1
      %p137 = scmp.ne.s32.totalorder %s132, %s134
      %p138 = scmp.eq.s32.totalorder %s21, 0
      %p139 = por %p137, %p138
      %p140 = scmp.ne.s32.totalorder %s132, %s134
      %p141 = scmp.eq.s32.totalorder %s26, 1
      %p142 = por %p140, %p141
      %p143 = scmp.ne.s32.totalorder %s134, %s135
      %p144 = scmp.eq.s32.totalorder %s26, 0
      %p145 = por %p143, %p144
      %p146 = scmp.ne.s32.totalorder %s134, %s135
      %p147 = scmp.eq.s32.totalorder %s27, 1
      %p148 = por %p146, %p147
      %p150 = scmp.ne.s32.totalorder %s135, %s149
      %p151 = scmp.eq.s32.totalorder %s27, 0
      %p152 = por %p150, %p151
      %s154 = sadd.s32 %s153, 1
      %p157 = scmp.eq.s32.totalorder %s21, 1
      %p158 = scmp.ne.s32.totalorder %s153, %s155
      %p159 = scmp.eq.s32.totalorder %s21, 0
      %p160 = por %p158, %p159
      %p161 = scmp.ne.s32.totalorder %s153, %s155
      %p162 = scmp.eq.s32.totalorder %s26, 1
      %p163 = por %p161, %p162
      %p164 = scmp.ne.s32.totalorder %s155, %s156
      %p165 = scmp.eq.s32.totalorder %s26, 0
      %p166 = por %p164, %p165
      %p167 = scmp.ne.s32.totalorder %s155, %s156
      %p168 = scmp.eq.s32.totalorder %s27, 1
      %p169 = por %p167, %p168
      %p171 = scmp.ne.s32.totalorder %s156, %s170
      %p172 = scmp.eq.s32.totalorder %s27, 0
      %p173 = por %p171, %p172
      %s175 = sadd.s32 %s174, 1
      %p178 = scmp.eq.s32.totalorder %s21, 1
      %p179 = scmp.ne.s32.totalorder %s174, %s176
      %p180 = scmp.eq.s32.totalorder %s21, 0
      %p181 = por %p179, %p180
      %p182 = scmp.ne.s32.totalorder %s174, %s176
      %p183 = scmp.eq.s32.totalorder %s26, 1
      %p184 = por %p182, %p183
      %p185 = scmp.ne.s32.totalorder %s176, %s177
      %p186 = scmp.eq.s32.totalorder %s26, 0
      %p187 = por %p185, %p186
      %p188 = scmp.ne.s32.totalorder %s176, %s177
      %p189 = scmp.eq.s32.totalorder %s27, 1
      %p190 = por %p188, %p189
      %p192 = scmp.ne.s32.totalorder %s177, %s191
      %p193 = scmp.eq.s32.totalorder %s27, 0
      %p194 = por %p192, %p193
      %s195 = ssub.s32 %s28, %s40
      %s196 = ssub.s32 %s29, %s36
      %s197 = sor.u32 %s195, %s196
      %p198 = scmp.eq.s32.totalorder %s197, 0
      %s200 = sadd.s32 %s199, 1
      %s201 = scalar_select %p198, %s199, %s200
      %p204 = pneg %p198
      %p205 = scmp.eq.s32.totalorder %s21, 1
      %p206 = por %p204, %p205
      %p207 = scmp.ne.s32.totalorder %s199, %s202
      %p208 = scmp.eq.s32.totalorder %s21, 0
      %p209 = por %p207, %p208
      %p210 = scmp.ne.s32.totalorder %s199, %s202
      %p211 = scmp.eq.s32.totalorder %s26, 1
      %p212 = por %p210, %p211
      %p213 = scmp.ne.s32.totalorder %s202, %s203
      %p214 = scmp.eq.s32.totalorder %s26, 0
      %p215 = por %p213, %p214
      %p216 = scmp.ne.s32.totalorder %s202, %s203
      %p217 = scmp.eq.s32.totalorder %s27, 1
      %p218 = por %p216, %p217
      %p220 = scmp.ne.s32.totalorder %s203, %s219
      %p221 = scmp.eq.s32.totalorder %s27, 0
      %p222 = por %p220, %p221
      %p223 = scmp.le.s32.totalorder 1, %s21
      %p224 = scmp.lt.s32.totalorder %s21, 3
      %p225 = pnand %p223, %p224
      %p226 = pneg %p225
      // Predicated region
      $region9: #{tpu_custom_call.1} parent=5 // pred_check
        _
      $region10: #{tpu_custom_call.1} parent=5 // pred_check_branch
        %228 = sbr.rel (%p225) target = $region12
      $region11: #{tpu_custom_call.1} parent=5 // pred_region
        %s229 = ssub.s32 %s21, 1
        // Predicated region
        $region13: #{tpu_custom_call.1} parent=11 // pred_check
          %p230 = pneg %p82
        $region14: #{tpu_custom_call.1} parent=11 // pred_check_branch
          %232 = sbr.rel (%p230) target = $region16
        $region15: #{tpu_custom_call.1} parent=11 // pred_region
          %s234 = ssub.s32 6144, 6144
          %235 = vsyncadd [#allocation8], %s234
          %s236 = sshll.u32 [#allocation7], 4
          %s237 = int_to_ptr.vmem [resolvable:$true] %s236
          %242 = dma.hbm_to_vmem [thread:$0]  %s1, 6144, %s237, [#allocation8], 128, 128, 8
        $region16: #{tpu_custom_call.1} parent=11 // pred_fallthru
          _
        // Predicated region
        $region17: #{tpu_custom_call.1} parent=11 // pred_check
          %p243 = pneg %p103
        $region18: #{tpu_custom_call.1} parent=11 // pred_check_branch
          %245 = sbr.rel (%p243) target = $region20
        $region19: #{tpu_custom_call.1} parent=11 // pred_region
          _
        $region20: #{tpu_custom_call.1} parent=11 // pred_fallthru
          _
        // Predicated region
        $region21: #{tpu_custom_call.1} parent=11 // pred_check
          %p246 = pneg %p124
        $region22: #{tpu_custom_call.1} parent=11 // pred_check_branch
          %248 = sbr.rel (%p246) target = $region24
        $region23: #{tpu_custom_call.1} parent=11 // pred_region
          %s250 = ssub.s32 6144, 6144
          %251 = vsyncadd [#allocation8], %s250
          %s252 = sshll.u32 [#allocation9], 4
          %s253 = int_to_ptr.vmem [resolvable:$true] %s252
          %258 = dma.hbm_to_vmem [thread:$0]  %s3, 6144, %s253, [#allocation8], 128, 128, 8
        $region24: #{tpu_custom_call.1} parent=11 // pred_fallthru
          _
        // Predicated region
        $region25: #{tpu_custom_call.1} parent=11 // pred_check
          %p259 = pneg %p145
        $region26: #{tpu_custom_call.1} parent=11 // pred_check_branch
          %261 = sbr.rel (%p259) target = $region28
        $region27: #{tpu_custom_call.1} parent=11 // pred_region
          _
        $region28: #{tpu_custom_call.1} parent=11 // pred_fallthru
          _
        // Predicated region
        $region29: #{tpu_custom_call.1} parent=11 // pred_check
          %p262 = pneg %p166
        $region30: #{tpu_custom_call.1} parent=11 // pred_check_branch
          %264 = sbr.rel (%p262) target = $region32
        $region31: #{tpu_custom_call.1} parent=11 // pred_region
          %s266 = ssub.s32 2048, 2048
          %267 = vsyncadd [#allocation11], %s266
          %s268 = sshll.u32 [#allocation10], 4
          %s269 = int_to_ptr.vmem [resolvable:$true] %s268
          %274 = dma.hbm_to_vmem [thread:$0]  %s5, 2048, %s269, [#allocation11], 128, 128, 8
        $region32: #{tpu_custom_call.1} parent=11 // pred_fallthru
          _
        // Predicated region
        $region33: #{tpu_custom_call.1} parent=11 // pred_check
          %p275 = pneg %p187
        $region34: #{tpu_custom_call.1} parent=11 // pred_check_branch
          %277 = sbr.rel (%p275) target = $region36
        $region35: #{tpu_custom_call.1} parent=11 // pred_region
          _
        $region36: #{tpu_custom_call.1} parent=11 // pred_fallthru
          _
      $region12: #{tpu_custom_call.1} parent=5 // pred_fallthru
        _
      %p278 = scmp.lt.s32.totalorder %s21, 2
      // Predicated region
      $region37: #{tpu_custom_call.1} parent=5 // pred_check
        %p279 = pneg %p278
      $region38: #{tpu_custom_call.1} parent=5 // pred_check_branch
        %281 = sbr.rel (%p279) target = $region40
      $region39: #{tpu_custom_call.1} parent=5 // pred_region
        // Predicated region
        $region41: #{tpu_custom_call.1} parent=39 // pred_check
          %p282 = pneg %p55
        $region42: #{tpu_custom_call.1} parent=39 // pred_check_branch
          %284 = sbr.rel (%p282) target = $region44
        $region43: #{tpu_custom_call.1} parent=39 // pred_region
          %s285 = sand.u32 %s45, 1
          %s286 = scalar_lea.sflag [#allocation5], %s285
          %s287 = sand.u32 %s45, 1
          %s288 = smul.addr %s287, 16
          %s289 = scalar_lea.vmem [#allocation4], %s288
          %s290 = smul.u32 2, %s29
          %s292 = ssub.s32 256, 256
          %293 = vsyncadd %s286, %s292
          %s294 = smul.addr %s28, 2
          %s295 = sadd.s32 %s290, %s294
          %s296 = smul.addr %s295, 128
          %s297 = scalar_lea.hbm %s0, %s296
          %s298 = sshll.u32 %s289, 4
          %s299 = int_to_ptr.vmem [resolvable:$true] %s298
          %304 = dma.hbm_to_vmem [thread:$0]  %s297, 256, %s299, %s286, 128, 128, 8
        $region44: #{tpu_custom_call.1} parent=39 // pred_fallthru
          _
      $region40: #{tpu_custom_call.1} parent=5 // pred_fallthru
        _
      %p305 = scmp.le.s32.totalorder 1, %s21
      %p306 = scmp.lt.s32.totalorder %s21, 3
      %p307 = pnand %p305, %p306
      %p308 = pneg %p307
      // Predicated region
      $region45: #{tpu_custom_call.1} parent=5 // pred_check
        _
      $region46: #{tpu_custom_call.1} parent=5 // pred_check_branch
        %310 = sbr.rel (%p307) target = $region48
      $region47: #{tpu_custom_call.1} parent=5 // pred_region
        %s311 = ssub.s32 %s21, 1
        %s312 = sand.u32 %s48, 1
        %s313 = scalar_lea.sflag [#allocation5], %s312
        %s314 = sand.u32 %s48, 1
        %s315 = smul.addr %s314, 16
        %s316 = scalar_lea.vmem [#allocation4], %s315
        // Predicated region
        $region49: #{tpu_custom_call.1} parent=47 // pred_check
          %p317 = pneg %p61
        $region50: #{tpu_custom_call.1} parent=47 // pred_check_branch
          %319 = sbr.rel (%p317) target = $region52
        $region51: #{tpu_custom_call.1} parent=47 // pred_region
          %320 = dma.done %s313, 256
        $region52: #{tpu_custom_call.1} parent=47 // pred_fallthru
          _
        // Predicated region
        $region53: #{tpu_custom_call.1} parent=47 // pred_check
          %p321 = pneg %p82
        $region54: #{tpu_custom_call.1} parent=47 // pred_check_branch
          %323 = sbr.rel (%p321) target = $region56
        $region55: #{tpu_custom_call.1} parent=47 // pred_region
          %324 = dma.done [#allocation8], 6144
        $region56: #{tpu_custom_call.1} parent=47 // pred_fallthru
          _
        // Predicated region
        $region57: #{tpu_custom_call.1} parent=47 // pred_check
          %p325 = pneg %p124
        $region58: #{tpu_custom_call.1} parent=47 // pred_check_branch
          %327 = sbr.rel (%p325) target = $region60
        $region59: #{tpu_custom_call.1} parent=47 // pred_region
          %328 = dma.done [#allocation8], 6144
        $region60: #{tpu_custom_call.1} parent=47 // pred_fallthru
          _
        // Predicated region
        $region61: #{tpu_custom_call.1} parent=47 // pred_check
          %p329 = pneg %p166
        $region62: #{tpu_custom_call.1} parent=47 // pred_check_branch
          %331 = sbr.rel (%p329) target = $region64
        $region63: #{tpu_custom_call.1} parent=47 // pred_region
          %332 = dma.done [#allocation11], 2048
        $region64: #{tpu_custom_call.1} parent=47 // pred_fallthru
          _
        %s333 = sand.u32 %s48, 1
        %s334 = scalar_lea.sflag [#allocation5], %s333
        %s335 = sand.u32 %s48, 1
        %s336 = smul.addr %s335, 16
        %s337 = scalar_lea.vmem [#allocation4], %s336
        %p338 = pneg %p61
        %p339 = pneg %p58
        %p340 = pneg %p82
        %p341 = pneg %p79
        %p342 = pneg %p103
        %p343 = pneg %p100
        %p344 = pneg %p124
        %p345 = pneg %p121
        %p346 = pneg %p145
        %p347 = pneg %p142
        %p348 = pneg %p166
        %p349 = pneg %p163
        %p350 = pneg %p187
        %p351 = pneg %p184
        %p352 = pneg %p215
        %p353 = pneg %p212
        %s354 = sand.u32 %s202, 1
        %s355 = scalar_lea.sflag [#allocation6], %s354
        %s356 = sand.u32 %s202, 1
        %s357 = smul.addr %s356, 16
        %s358 = scalar_lea.vmem [#allocation12], %s357
        %s359 = smul.u32 2, %s31
        %s360 = smul.u32 2, %s31
        %p361 = scmp.eq.s32.totalorder %s31, 0
        // Predicated region
        $region65: #{tpu_custom_call.1} parent=47 // pred_check
          %p362 = pneg %p361
        $region66: #{tpu_custom_call.1} parent=47 // pred_check_branch
          %364 = sbr.rel (%p362) target = $region68
        $region67: #{tpu_custom_call.1} parent=47 // pred_region
          %365 = vst [vmem:[#allocation2] sm:$0xff] 0.0
          %366 = vst [vmem:[#allocation3] sm:$0xff] 0.0
        $region68: #{tpu_custom_call.1} parent=47 // pred_fallthru
          _
        %v367 = vld [vmem:[%s316] sm:$0xff]
        %v368 = vld [vmem:[%s316 + $0x8] sm:$0xff]
        %369 = vst [vmem:[#allocation2 + $0x8] sm:$0xff] %v367
        %370 = vst [vmem:[#allocation2 + $0x10] sm:$0xff] %v368
        %v371 = vld [vmem:[#allocation2 + $0x4] sm:$0xff]
        %v372 = vld [vmem:[#allocation2 + $0xc] sm:$0xff]
        %v373 = vld [vmem:[#allocation2 + $0x6] sm:$0xff]
        %v374 = vld [vmem:[#allocation2 + $0xe] sm:$0xff]
        %v375 = vld [vmem:[#allocation2 + $0x8] sm:$0xff]
        %v376 = vld [vmem:[#allocation2 + $0x10] sm:$0xff]
        %v377 = vld [vmem:[#allocation7] sm:$0xff]
        %v378 = vld [vmem:[#allocation7 + $0x8] sm:$0xff]
        %v379 = vld [vmem:[#allocation7 + $0x10] sm:$0xff]
        %v380 = vld [vmem:[#allocation7 + $0x18] sm:$0xff]
        %v381 = vld [vmem:[#allocation7 + $0x20] sm:$0xff]
        %v382 = vld [vmem:[#allocation7 + $0x28] sm:$0xff]
        %v383 = vld [vmem:[#allocation7 + $0x30] sm:$0xff]
        %v384 = vld [vmem:[#allocation7 + $0x38] sm:$0xff]
        %v385 = vld [vmem:[#allocation7 + $0x40] sm:$0xff]
        %v386 = vld [vmem:[#allocation7 + $0x48] sm:$0xff]
        %v387 = vld [vmem:[#allocation7 + $0x50] sm:$0xff]
        %v388 = vld [vmem:[#allocation7 + $0x58] sm:$0xff]
        %v389 = vld [vmem:[#allocation7 + $0x60] sm:$0xff]
        %v390 = vld [vmem:[#allocation7 + $0x68] sm:$0xff]
        %v391 = vld [vmem:[#allocation7 + $0x70] sm:$0xff]
        %v392 = vld [vmem:[#allocation7 + $0x78] sm:$0xff]
        %v393 = vld [vmem:[#allocation7 + $0x80] sm:$0xff]
        %v394 = vld [vmem:[#allocation7 + $0x88] sm:$0xff]
        %v395 = vld [vmem:[#allocation7 + $0x90] sm:$0xff]
        %v396 = vld [vmem:[#allocation7 + $0x98] sm:$0xff]
        %v397 = vld [vmem:[#allocation7 + $0xa0] sm:$0xff]
        %v398 = vld [vmem:[#allocation7 + $0xa8] sm:$0xff]
        %v399 = vld [vmem:[#allocation7 + $0xb0] sm:$0xff]
        %v400 = vld [vmem:[#allocation7 + $0xb8] sm:$0xff]
        %v401 = vld [vmem:[#allocation7 + $0xc0] sm:$0xff]
        %v402 = vld [vmem:[#allocation7 + $0xc8] sm:$0xff]
        %v403 = vld [vmem:[#allocation7 + $0xd0] sm:$0xff]
        %v404 = vld [vmem:[#allocation7 + $0xd8] sm:$0xff]
        %v405 = vld [vmem:[#allocation7 + $0xe0] sm:$0xff]
        %v406 = vld [vmem:[#allocation7 + $0xe8] sm:$0xff]
        %v407 = vld [vmem:[#allocation7 + $0xf0] sm:$0xff]
        %v408 = vld [vmem:[#allocation7 + $0xf8] sm:$0xff]
        %v409 = vld [vmem:[#allocation7 + $0x100] sm:$0xff]
        %v410 = vld [vmem:[#allocation7 + $0x108] sm:$0xff]
        %v411 = vld [vmem:[#allocation7 + $0x110] sm:$0xff]
        %v412 = vld [vmem:[#allocation7 + $0x118] sm:$0xff]
        %v413 = vld [vmem:[#allocation7 + $0x120] sm:$0xff]
        %v414 = vld [vmem:[#allocation7 + $0x128] sm:$0xff]
        %v415 = vld [vmem:[#allocation7 + $0x130] sm:$0xff]
        %v416 = vld [vmem:[#allocation7 + $0x138] sm:$0xff]
        %v417 = vld [vmem:[#allocation7 + $0x140] sm:$0xff]
        %v418 = vld [vmem:[#allocation7 + $0x148] sm:$0xff]
        %v419 = vld [vmem:[#allocation7 + $0x150] sm:$0xff]
        %v420 = vld [vmem:[#allocation7 + $0x158] sm:$0xff]
        %v421 = vld [vmem:[#allocation7 + $0x160] sm:$0xff]
        %v422 = vld [vmem:[#allocation7 + $0x168] sm:$0xff]
        %v423 = vld [vmem:[#allocation7 + $0x170] sm:$0xff]
        %v424 = vld [vmem:[#allocation7 + $0x178] sm:$0xff]
        %v425 = vld [vmem:[%s2] sm:$0x1]
        %v427 = vlaneseq
        %v428 = vshrl.u32 %v427, 7
        %v429 = vsub.s32 0, %v428
        %v430 = vrot.slane %v425, %v429
        %432 = vmatprep.subr.mxu0 0.0
        %433 = vmatpush1.msra.mxu0 %v377
        %434 = vmatprep.subr.mxu0 0.0
        %435 = vmatpush1.msra.mxu0 %v378
        %436 = vmatprep.subr.mxu0 0.0
        %437 = vmatpush1.msra.mxu0 %v379
        %438 = vmatprep.subr.mxu0 0.0
        %439 = vmatpush1.msra.mxu0 %v380
        %440 = vmatprep.subr.mxu0 0.0
        %441 = vmatpush1.msra.mxu0 %v381
        %442 = vmatprep.subr.mxu0 0.0
        %443 = vmatpush1.msra.mxu0 %v382
        %444 = vmatprep.subr.mxu0 0.0
        %445 = vmatpush1.msra.mxu0 %v383
        %446 = vmatprep.subr.mxu0 0.0
        %447 = vmatpush1.msra.mxu0 %v384
        %448 = vmatprep.subr.mxu0 0.0
        %449 = vmatpush1.msra.mxu0 %v385
        %450 = vmatprep.subr.mxu0 0.0
        %451 = vmatpush1.msra.mxu0 %v386
        %452 = vmatprep.subr.mxu0 0.0
        %453 = vmatpush1.msra.mxu0 %v387
        %454 = vmatprep.subr.mxu0 0.0
        %455 = vmatpush1.msra.mxu0 %v388
        %456 = vmatprep.subr.mxu0 0.0
        %457 = vmatpush1.msra.mxu0 %v389
        %458 = vmatprep.subr.mxu0 0.0
        %459 = vmatpush1.msra.mxu0 %v390
        %460 = vmatprep.subr.mxu0 0.0
        %461 = vmatpush1.msra.mxu0 %v391
        %462 = vmatprep.subr.mxu0 0.0
        %463 = vmatpush1.msra.mxu0 %v392
        %464 = vmatprep.subr.mxu0 0.0
        %465 = vmatpush1.msra.mxu0 %v393
        %466 = vmatprep.subr.mxu0 0.0
        %467 = vmatpush1.msra.mxu0 %v394
        %468 = vmatprep.subr.mxu0 0.0
        %469 = vmatpush1.msra.mxu0 %v395
        %470 = vmatprep.subr.mxu0 0.0
        %471 = vmatpush1.msra.mxu0 %v396
        %472 = vmatprep.subr.mxu0 0.0
        %473 = vmatpush1.msra.mxu0 %v397
        %474 = vmatprep.subr.mxu0 0.0
        %475 = vmatpush1.msra.mxu0 %v398
        %476 = vmatprep.subr.mxu0 0.0
        %477 = vmatpush1.msra.mxu0 %v399
        %478 = vmatprep.subr.mxu0 0.0
        %479 = vmatpush1.msra.mxu0 %v400
        %480 = vmatprep.subr.mxu0 0.0
        %481 = vmatpush1.msra.mxu0 %v401
        %482 = vmatprep.subr.mxu0 0.0
        %483 = vmatpush1.msra.mxu0 %v402
        %484 = vmatprep.subr.mxu0 0.0
        %485 = vmatpush1.msra.mxu0 %v403
        %486 = vmatprep.subr.mxu0 0.0
        %487 = vmatpush1.msra.mxu0 %v404
        %488 = vmatprep.subr.mxu0 0.0
        %489 = vmatpush1.msra.mxu0 %v405
        %490 = vmatprep.subr.mxu0 0.0
        %491 = vmatpush1.msra.mxu0 %v406
        %492 = vmatprep.subr.mxu0 0.0
        %493 = vmatpush1.msra.mxu0 %v407
        %494 = vmatprep.subr.mxu0 0.0
        %495 = vmatpush1.msra.mxu0 %v408
        %496 = vmatprep.mubr.f32.mxu0 %v373
        %497 = vmatmul.mubr.f32.gmra.mrb[0].mxu0 %v371
        %v498 = vpop.f32.mrb[0].mxu0
        %v499 = vadd.f32 %v430, %v498
        %v500 = vpop.f32.mrb[0].mxu0
        %501 = vmatprep.mubr.f32.mxu0 %v374
        %502 = vmatmul.mubr.f32.gmra.mrb[0].mxu0 %v372
        %v503 = vpop.f32.mrb[0].mxu0
        %v504 = vadd.f32 %v430, %v503
        %v505 = vpop.f32.mrb[0].mxu0
        %506 = vdwg.mxu0
        %507 = vmatprep.subr.mxu0 0.0
        %508 = vmatpush1.msra.mxu0 %v409
        %509 = vmatprep.subr.mxu0 0.0
        %510 = vmatpush1.msra.mxu0 %v410
        %511 = vmatprep.subr.mxu0 0.0
        %512 = vmatpush1.msra.mxu0 %v411
        %513 = vmatprep.subr.mxu0 0.0
        %514 = vmatpush1.msra.mxu0 %v412
        %515 = vmatprep.subr.mxu0 0.0
        %516 = vmatpush1.msra.mxu0 %v413
        %517 = vmatprep.subr.mxu0 0.0
        %518 = vmatpush1.msra.mxu0 %v414
        %519 = vmatprep.subr.mxu0 0.0
        %520 = vmatpush1.msra.mxu0 %v415
        %521 = vmatprep.subr.mxu0 0.0
        %522 = vmatpush1.msra.mxu0 %v416
        %523 = vmatprep.subr.mxu0 0.0
        %524 = vmatpush1.msra.mxu0 %v417
        %525 = vmatprep.subr.mxu0 0.0
        %526 = vmatpush1.msra.mxu0 %v418
        %527 = vmatprep.subr.mxu0 0.0
        %528 = vmatpush1.msra.mxu0 %v419
        %529 = vmatprep.subr.mxu0 0.0
        %530 = vmatpush1.msra.mxu0 %v420
        %531 = vmatprep.subr.mxu0 0.0
        %532 = vmatpush1.msra.mxu0 %v421
        %533 = vmatprep.subr.mxu0 0.0
        %534 = vmatpush1.msra.mxu0 %v422
        %535 = vmatprep.subr.mxu0 0.0
        %536 = vmatpush1.msra.mxu0 %v423
        %537 = vmatprep.subr.mxu0 0.0
        %538 = vmatpush1.msra.mxu0 %v424
        %539 = vmatprep.subr.mxu0 0.0
        %540 = vmatpush1.msra.mxu0 0.0
        %541 = vmatprep.subr.mxu0 0.0
        %542 = vmatpush1.msra.mxu0 0.0
        %543 = vmatprep.subr.mxu0 0.0
        %544 = vmatpush1.msra.mxu0 0.0
        %545 = vmatprep.subr.mxu0 0.0
        %546 = vmatpush1.msra.mxu0 0.0
        %547 = vmatprep.subr.mxu0 0.0
        %548 = vmatpush1.msra.mxu0 0.0
        %549 = vmatprep.subr.mxu0 0.0
        %550 = vmatpush1.msra.mxu0 0.0
        %551 = vmatprep.subr.mxu0 0.0
        %552 = vmatpush1.msra.mxu0 0.0
        %553 = vmatprep.subr.mxu0 0.0
        %554 = vmatpush1.msra.mxu0 0.0
        %555 = vmatprep.subr.mxu0 0.0
        %556 = vmatpush1.msra.mxu0 0.0
        %557 = vmatprep.subr.mxu0 0.0
        %558 = vmatpush1.msra.mxu0 0.0
        %559 = vmatprep.subr.mxu0 0.0
        %560 = vmatpush1.msra.mxu0 0.0
        %561 = vmatprep.subr.mxu0 0.0
        %562 = vmatpush1.msra.mxu0 0.0
        %563 = vmatprep.subr.mxu0 0.0
        %564 = vmatpush1.msra.mxu0 0.0
        %565 = vmatprep.subr.mxu0 0.0
        %566 = vmatpush1.msra.mxu0 0.0
        %567 = vmatprep.subr.mxu0 0.0
        %568 = vmatpush1.msra.mxu0 0.0
        %569 = vmatprep.subr.mxu0 0.0
        %570 = vmatpush1.msra.mxu0 0.0
        %571 = vmatprep.mubr.f32.mxu0 0.0
        %572 = vmatmul.mubr.f32.gmra.mrb[0].mxu0 %v375
        %v573 = vpop.f32.mrb[0].mxu0
        %v574 = vadd.f32 %v499, %v573
        %v575 = vpop.f32.mrb[0].mxu0
        %576 = vmatprep.mubr.f32.mxu0 0.0
        %577 = vmatmul.mubr.f32.gmra.mrb[0].mxu0 %v376
        %v578 = vpop.f32.mrb[0].mxu0
        %v579 = vadd.f32 %v504, %v578
        %v580 = vpop.f32.mrb[0].mxu0
        %581 = vdwg.mxu0
        %v582 = vmax.f32 %v574, 0.0
        %v583 = vmax.f32 %v579, 0.0
        %584 = vst [vmem:[#allocation3 + $0x8] sm:$0xff] %v582
        %585 = vst [vmem:[#allocation3 + $0x10] sm:$0xff] %v583
        %v586 = vld [vmem:[#allocation3 + $0x4] sm:$0xff]
        %v587 = vld [vmem:[#allocation3 + $0xc] sm:$0xff]
        %v588 = vld [vmem:[#allocation3 + $0x6] sm:$0xff]
        %v589 = vld [vmem:[#allocation3 + $0xe] sm:$0xff]
        %v590 = vld [vmem:[#allocation3 + $0x8] sm:$0xff]
        %v591 = vld [vmem:[#allocation3 + $0x10] sm:$0xff]
        %v592 = vld [vmem:[#allocation9] sm:$0xff]
        %v593 = vld [vmem:[#allocation9 + $0x8] sm:$0xff]
        %v594 = vld [vmem:[#allocation9 + $0x10] sm:$0xff]
        %v595 = vld [vmem:[#allocation9 + $0x18] sm:$0xff]
        %v596 = vld [vmem:[#allocation9 + $0x20] sm:$0xff]
        %v597 = vld [vmem:[#allocation9 + $0x28] sm:$0xff]
        %v598 = vld [vmem:[#allocation9 + $0x30] sm:$0xff]
        %v599 = vld [vmem:[#allocation9 + $0x38] sm:$0xff]
        %v600 = vld [vmem:[#allocation9 + $0x40] sm:$0xff]
        %v601 = vld [vmem:[#allocation9 + $0x48] sm:$0xff]
        %v602 = vld [vmem:[#allocation9 + $0x50] sm:$0xff]
        %v603 = vld [vmem:[#allocation9 + $0x58] sm:$0xff]
        %v604 = vld [vmem:[#allocation9 + $0x60] sm:$0xff]
        %v605 = vld [vmem:[#allocation9 + $0x68] sm:$0xff]
        %v606 = vld [vmem:[#allocation9 + $0x70] sm:$0xff]
        %v607 = vld [vmem:[#allocation9 + $0x78] sm:$0xff]
        %v608 = vld [vmem:[#allocation9 + $0x80] sm:$0xff]
        %v609 = vld [vmem:[#allocation9 + $0x88] sm:$0xff]
        %v610 = vld [vmem:[#allocation9 + $0x90] sm:$0xff]
        %v611 = vld [vmem:[#allocation9 + $0x98] sm:$0xff]
        %v612 = vld [vmem:[#allocation9 + $0xa0] sm:$0xff]
        %v613 = vld [vmem:[#allocation9 + $0xa8] sm:$0xff]
        %v614 = vld [vmem:[#allocation9 + $0xb0] sm:$0xff]
        %v615 = vld [vmem:[#allocation9 + $0xb8] sm:$0xff]
        %v616 = vld [vmem:[#allocation9 + $0xc0] sm:$0xff]
        %v617 = vld [vmem:[#allocation9 + $0xc8] sm:$0xff]
        %v618 = vld [vmem:[#allocation9 + $0xd0] sm:$0xff]
        %v619 = vld [vmem:[#allocation9 + $0xd8] sm:$0xff]
        %v620 = vld [vmem:[#allocation9 + $0xe0] sm:$0xff]
        %v621 = vld [vmem:[#allocation9 + $0xe8] sm:$0xff]
        %v622 = vld [vmem:[#allocation9 + $0xf0] sm:$0xff]
        %v623 = vld [vmem:[#allocation9 + $0xf8] sm:$0xff]
        %v624 = vld [vmem:[#allocation9 + $0x100] sm:$0xff]
        %v625 = vld [vmem:[#allocation9 + $0x108] sm:$0xff]
        %v626 = vld [vmem:[#allocation9 + $0x110] sm:$0xff]
        %v627 = vld [vmem:[#allocation9 + $0x118] sm:$0xff]
        %v628 = vld [vmem:[#allocation9 + $0x120] sm:$0xff]
        %v629 = vld [vmem:[#allocation9 + $0x128] sm:$0xff]
        %v630 = vld [vmem:[#allocation9 + $0x130] sm:$0xff]
        %v631 = vld [vmem:[#allocation9 + $0x138] sm:$0xff]
        %v632 = vld [vmem:[#allocation9 + $0x140] sm:$0xff]
        %v633 = vld [vmem:[#allocation9 + $0x148] sm:$0xff]
        %v634 = vld [vmem:[#allocation9 + $0x150] sm:$0xff]
        %v635 = vld [vmem:[#allocation9 + $0x158] sm:$0xff]
        %v636 = vld [vmem:[#allocation9 + $0x160] sm:$0xff]
        %v637 = vld [vmem:[#allocation9 + $0x168] sm:$0xff]
        %v638 = vld [vmem:[#allocation9 + $0x170] sm:$0xff]
        %v639 = vld [vmem:[#allocation9 + $0x178] sm:$0xff]
        %v640 = vld [vmem:[%s4] sm:$0x1]
        %v642 = vlaneseq
        %v643 = vshrl.u32 %v642, 7
        %v644 = vsub.s32 0, %v643
        %v645 = vrot.slane %v640, %v644
        %647 = vmatprep.subr.mxu0 0.0
        %648 = vmatpush1.msra.mxu0 %v592
        %649 = vmatprep.subr.mxu0 0.0
        %650 = vmatpush1.msra.mxu0 %v593
        %651 = vmatprep.subr.mxu0 0.0
        %652 = vmatpush1.msra.mxu0 %v594
        %653 = vmatprep.subr.mxu0 0.0
        %654 = vmatpush1.msra.mxu0 %v595
        %655 = vmatprep.subr.mxu0 0.0
        %656 = vmatpush1.msra.mxu0 %v596
        %657 = vmatprep.subr.mxu0 0.0
        %658 = vmatpush1.msra.mxu0 %v597
        %659 = vmatprep.subr.mxu0 0.0
        %660 = vmatpush1.msra.mxu0 %v598
        %661 = vmatprep.subr.mxu0 0.0
        %662 = vmatpush1.msra.mxu0 %v599
        %663 = vmatprep.subr.mxu0 0.0
        %664 = vmatpush1.msra.mxu0 %v600
        %665 = vmatprep.subr.mxu0 0.0
        %666 = vmatpush1.msra.mxu0 %v601
        %667 = vmatprep.subr.mxu0 0.0
        %668 = vmatpush1.msra.mxu0 %v602
        %669 = vmatprep.subr.mxu0 0.0
        %670 = vmatpush1.msra.mxu0 %v603
        %671 = vmatprep.subr.mxu0 0.0
        %672 = vmatpush1.msra.mxu0 %v604
        %673 = vmatprep.subr.mxu0 0.0
        %674 = vmatpush1.msra.mxu0 %v605
        %675 = vmatprep.subr.mxu0 0.0
        %676 = vmatpush1.msra.mxu0 %v606
        %677 = vmatprep.subr.mxu0 0.0
        %678 = vmatpush1.msra.mxu0 %v607
        %679 = vmatprep.subr.mxu0 0.0
        %680 = vmatpush1.msra.mxu0 %v608
        %681 = vmatprep.subr.mxu0 0.0
        %682 = vmatpush1.msra.mxu0 %v609
        %683 = vmatprep.subr.mxu0 0.0
        %684 = vmatpush1.msra.mxu0 %v610
        %685 = vmatprep.subr.mxu0 0.0
        %686 = vmatpush1.msra.mxu0 %v611
        %687 = vmatprep.subr.mxu0 0.0
        %688 = vmatpush1.msra.mxu0 %v612
        %689 = vmatprep.subr.mxu0 0.0
        %690 = vmatpush1.msra.mxu0 %v613
        %691 = vmatprep.subr.mxu0 0.0
        %692 = vmatpush1.msra.mxu0 %v614
        %693 = vmatprep.subr.mxu0 0.0
        %694 = vmatpush1.msra.mxu0 %v615
        %695 = vmatprep.subr.mxu0 0.0
        %696 = vmatpush1.msra.mxu0 %v616
        %697 = vmatprep.subr.mxu0 0.0
        %698 = vmatpush1.msra.mxu0 %v617
        %699 = vmatprep.subr.mxu0 0.0
        %700 = vmatpush1.msra.mxu0 %v618
        %701 = vmatprep.subr.mxu0 0.0
        %702 = vmatpush1.msra.mxu0 %v619
        %703 = vmatprep.subr.mxu0 0.0
        %704 = vmatpush1.msra.mxu0 %v620
        %705 = vmatprep.subr.mxu0 0.0
        %706 = vmatpush1.msra.mxu0 %v621
        %707 = vmatprep.subr.mxu0 0.0
        %708 = vmatpush1.msra.mxu0 %v622
        %709 = vmatprep.subr.mxu0 0.0
        %710 = vmatpush1.msra.mxu0 %v623
        %711 = vmatprep.mubr.f32.mxu0 %v588
        %712 = vmatmul.mubr.f32.gmra.mrb[0].mxu0 %v586
        %v713 = vpop.f32.mrb[0].mxu0
        %v714 = vadd.f32 %v645, %v713
        %v715 = vpop.f32.mrb[0].mxu0
        %716 = vmatprep.mubr.f32.mxu0 %v589
        %717 = vmatmul.mubr.f32.gmra.mrb[0].mxu0 %v587
        %v718 = vpop.f32.mrb[0].mxu0
        %v719 = vadd.f32 %v645, %v718
        %v720 = vpop.f32.mrb[0].mxu0
        %721 = vdwg.mxu0
        %722 = vmatprep.subr.mxu0 0.0
        %723 = vmatpush1.msra.mxu0 %v624
        %724 = vmatprep.subr.mxu0 0.0
        %725 = vmatpush1.msra.mxu0 %v625
        %726 = vmatprep.subr.mxu0 0.0
        %727 = vmatpush1.msra.mxu0 %v626
        %728 = vmatprep.subr.mxu0 0.0
        %729 = vmatpush1.msra.mxu0 %v627
        %730 = vmatprep.subr.mxu0 0.0
        %731 = vmatpush1.msra.mxu0 %v628
        %732 = vmatprep.subr.mxu0 0.0
        %733 = vmatpush1.msra.mxu0 %v629
        %734 = vmatprep.subr.mxu0 0.0
        %735 = vmatpush1.msra.mxu0 %v630
        %736 = vmatprep.subr.mxu0 0.0
        %737 = vmatpush1.msra.mxu0 %v631
        %738 = vmatprep.subr.mxu0 0.0
        %739 = vmatpush1.msra.mxu0 %v632
        %740 = vmatprep.subr.mxu0 0.0
        %741 = vmatpush1.msra.mxu0 %v633
        %742 = vmatprep.subr.mxu0 0.0
        %743 = vmatpush1.msra.mxu0 %v634
        %744 = vmatprep.subr.mxu0 0.0
        %745 = vmatpush1.msra.mxu0 %v635
        %746 = vmatprep.subr.mxu0 0.0
        %747 = vmatpush1.msra.mxu0 %v636
        %748 = vmatprep.subr.mxu0 0.0
        %749 = vmatpush1.msra.mxu0 %v637
        %750 = vmatprep.subr.mxu0 0.0
        %751 = vmatpush1.msra.mxu0 %v638
        %752 = vmatprep.subr.mxu0 0.0
        %753 = vmatpush1.msra.mxu0 %v639
        %754 = vmatprep.subr.mxu0 0.0
        %755 = vmatpush1.msra.mxu0 0.0
        %756 = vmatprep.subr.mxu0 0.0
        %757 = vmatpush1.msra.mxu0 0.0
        %758 = vmatprep.subr.mxu0 0.0
        %759 = vmatpush1.msra.mxu0 0.0
        %760 = vmatprep.subr.mxu0 0.0
        %761 = vmatpush1.msra.mxu0 0.0
        %762 = vmatprep.subr.mxu0 0.0
        %763 = vmatpush1.msra.mxu0 0.0
        %764 = vmatprep.subr.mxu0 0.0
        %765 = vmatpush1.msra.mxu0 0.0
        %766 = vmatprep.subr.mxu0 0.0
        %767 = vmatpush1.msra.mxu0 0.0
        %768 = vmatprep.subr.mxu0 0.0
        %769 = vmatpush1.msra.mxu0 0.0
        %770 = vmatprep.subr.mxu0 0.0
        %771 = vmatpush1.msra.mxu0 0.0
        %772 = vmatprep.subr.mxu0 0.0
        %773 = vmatpush1.msra.mxu0 0.0
        %774 = vmatprep.subr.mxu0 0.0
        %775 = vmatpush1.msra.mxu0 0.0
        %776 = vmatprep.subr.mxu0 0.0
        %777 = vmatpush1.msra.mxu0 0.0
        %778 = vmatprep.subr.mxu0 0.0
        %779 = vmatpush1.msra.mxu0 0.0
        %780 = vmatprep.subr.mxu0 0.0
        %781 = vmatpush1.msra.mxu0 0.0
        %782 = vmatprep.subr.mxu0 0.0
        %783 = vmatpush1.msra.mxu0 0.0
        %784 = vmatprep.subr.mxu0 0.0
        %785 = vmatpush1.msra.mxu0 0.0
        %786 = vmatprep.mubr.f32.mxu0 0.0
        %787 = vmatmul.mubr.f32.gmra.mrb[0].mxu0 %v590
        %v788 = vpop.f32.mrb[0].mxu0
        %v789 = vadd.f32 %v714, %v788
        %v790 = vpop.f32.mrb[0].mxu0
        %791 = vmatprep.mubr.f32.mxu0 0.0
        %792 = vmatmul.mubr.f32.gmra.mrb[0].mxu0 %v591
        %v793 = vpop.f32.mrb[0].mxu0
        %v794 = vadd.f32 %v719, %v793
        %v795 = vpop.f32.mrb[0].mxu0
        %796 = vdwg.mxu0
        %v797 = vmax.f32 %v789, 0.0
        %v798 = vmax.f32 %v794, 0.0
        %v799 = vld [vmem:[%s316] sm:$0xff]
        %v800 = vld [vmem:[%s316 + $0x8] sm:$0xff]
        %v801 = vld [vmem:[#allocation10] sm:$0xff]
        %v802 = vld [vmem:[#allocation10 + $0x8] sm:$0xff]
        %v803 = vld [vmem:[#allocation10 + $0x10] sm:$0xff]
        %v804 = vld [vmem:[#allocation10 + $0x18] sm:$0xff]
        %v805 = vld [vmem:[#allocation10 + $0x20] sm:$0xff]
        %v806 = vld [vmem:[#allocation10 + $0x28] sm:$0xff]
        %v807 = vld [vmem:[#allocation10 + $0x30] sm:$0xff]
        %v808 = vld [vmem:[#allocation10 + $0x38] sm:$0xff]
        %v809 = vld [vmem:[#allocation10 + $0x40] sm:$0xff]
        %v810 = vld [vmem:[#allocation10 + $0x48] sm:$0xff]
        %v811 = vld [vmem:[#allocation10 + $0x50] sm:$0xff]
        %v812 = vld [vmem:[#allocation10 + $0x58] sm:$0xff]
        %v813 = vld [vmem:[#allocation10 + $0x60] sm:$0xff]
        %v814 = vld [vmem:[#allocation10 + $0x68] sm:$0xff]
        %v815 = vld [vmem:[#allocation10 + $0x70] sm:$0xff]
        %v816 = vld [vmem:[#allocation10 + $0x78] sm:$0xff]
        %v817 = vld [vmem:[%s6] sm:$0x1]
        %v819 = vlaneseq
        %v820 = vshrl.u32 %v819, 7
        %v821 = vsub.s32 0, %v820
        %v822 = vrot.slane %v817, %v821
        %824 = vmatprep.subr.mxu0 0.0
        %825 = vmatpush1.msra.mxu0 %v801
        %826 = vmatprep.subr.mxu0 0.0
        %827 = vmatpush1.msra.mxu0 %v802
        %828 = vmatprep.subr.mxu0 0.0
        %829 = vmatpush1.msra.mxu0 %v803
        %830 = vmatprep.subr.mxu0 0.0
        %831 = vmatpush1.msra.mxu0 %v804
        %832 = vmatprep.subr.mxu0 0.0
        %833 = vmatpush1.msra.mxu0 %v805
        %834 = vmatprep.subr.mxu0 0.0
        %835 = vmatpush1.msra.mxu0 %v806
        %836 = vmatprep.subr.mxu0 0.0
        %837 = vmatpush1.msra.mxu0 %v807
        %838 = vmatprep.subr.mxu0 0.0
        %839 = vmatpush1.msra.mxu0 %v808
        %840 = vmatprep.subr.mxu0 0.0
        %841 = vmatpush1.msra.mxu0 %v809
        %842 = vmatprep.subr.mxu0 0.0
        %843 = vmatpush1.msra.mxu0 %v810
        %844 = vmatprep.subr.mxu0 0.0
        %845 = vmatpush1.msra.mxu0 %v811
        %846 = vmatprep.subr.mxu0 0.0
        %847 = vmatpush1.msra.mxu0 %v812
        %848 = vmatprep.subr.mxu0 0.0
        %849 = vmatpush1.msra.mxu0 %v813
        %850 = vmatprep.subr.mxu0 0.0
        %851 = vmatpush1.msra.mxu0 %v814
        %852 = vmatprep.subr.mxu0 0.0
        %853 = vmatpush1.msra.mxu0 %v815
        %854 = vmatprep.subr.mxu0 0.0
        %855 = vmatpush1.msra.mxu0 %v816
        %856 = vmatprep.subr.mxu0 0.0
        %857 = vmatpush1.msra.mxu0 0.0
        %858 = vmatprep.subr.mxu0 0.0
        %859 = vmatpush1.msra.mxu0 0.0
        %860 = vmatprep.subr.mxu0 0.0
        %861 = vmatpush1.msra.mxu0 0.0
        %862 = vmatprep.subr.mxu0 0.0
        %863 = vmatpush1.msra.mxu0 0.0
        %864 = vmatprep.subr.mxu0 0.0
        %865 = vmatpush1.msra.mxu0 0.0
        %866 = vmatprep.subr.mxu0 0.0
        %867 = vmatpush1.msra.mxu0 0.0
        %868 = vmatprep.subr.mxu0 0.0
        %869 = vmatpush1.msra.mxu0 0.0
        %870 = vmatprep.subr.mxu0 0.0
        %871 = vmatpush1.msra.mxu0 0.0
        %872 = vmatprep.subr.mxu0 0.0
        %873 = vmatpush1.msra.mxu0 0.0
        %874 = vmatprep.subr.mxu0 0.0
        %875 = vmatpush1.msra.mxu0 0.0
        %876 = vmatprep.subr.mxu0 0.0
        %877 = vmatpush1.msra.mxu0 0.0
        %878 = vmatprep.subr.mxu0 0.0
        %879 = vmatpush1.msra.mxu0 0.0
        %880 = vmatprep.subr.mxu0 0.0
        %881 = vmatpush1.msra.mxu0 0.0
        %882 = vmatprep.subr.mxu0 0.0
        %883 = vmatpush1.msra.mxu0 0.0
        %884 = vmatprep.subr.mxu0 0.0
        %885 = vmatpush1.msra.mxu0 0.0
        %886 = vmatprep.subr.mxu0 0.0
        %887 = vmatpush1.msra.mxu0 0.0
        %888 = vmatprep.mubr.f32.mxu0 0.0
        %889 = vmatmul.mubr.f32.gmra.mrb[0].mxu0 %v799
        %v890 = vpop.f32.mrb[0].mxu0
        %v891 = vadd.f32 %v822, %v890
        %v892 = vpop.f32.mrb[0].mxu0
        %893 = vmatprep.mubr.f32.mxu0 0.0
        %894 = vmatmul.mubr.f32.gmra.mrb[0].mxu0 %v800
        %v895 = vpop.f32.mrb[0].mxu0
        %v896 = vadd.f32 %v822, %v895
        %v897 = vpop.f32.mrb[0].mxu0
        %898 = vdwg.mxu0
        %v899 = vadd.f32 %v797, %v891
        %v900 = vadd.f32 %v798, %v896
        %v901 = vmax.f32 %v899, 0.0
        %v902 = vmax.f32 %v900, 0.0
        %903 = vst [vmem:[%s358] sm:$0xff] %v901
        %904 = vst [vmem:[%s358 + $0x8] sm:$0xff] %v902
        %s905 = sadd.s32 %s31, 1
        %p906 = scmp.lt.s32.totalorder %s905, 1
        // Predicated region
        $region69: #{tpu_custom_call.1} parent=47 // pred_check
          %p907 = pneg %p906
        $region70: #{tpu_custom_call.1} parent=47 // pred_check_branch
          %909 = sbr.rel (%p907) target = $region72
        $region71: #{tpu_custom_call.1} parent=47 // pred_region
          %v910 = vld [vmem:[#allocation2 + $0x14] sm:$0xf]
          %v911 = vld [vmem:[#allocation3 + $0x14] sm:$0xf]
          %912 = vst [vmem:[#allocation2 + $0x4] sm:$0xf] %v910
          %913 = vst [vmem:[#allocation3 + $0x4] sm:$0xf] %v911
        $region72: #{tpu_custom_call.1} parent=47 // pred_fallthru
          _
        %s914 = sand.u32 %s202, 1
        %s915 = scalar_lea.sflag [#allocation6], %s914
        %s916 = sand.u32 %s202, 1
        %s917 = smul.addr %s916, 16
        %s918 = scalar_lea.vmem [#allocation12], %s917
        // Predicated region
        $region73: #{tpu_custom_call.1} parent=47 // pred_check
          %p919 = pneg %p212
        $region74: #{tpu_custom_call.1} parent=47 // pred_check_branch
          %921 = sbr.rel (%p919) target = $region76
        $region75: #{tpu_custom_call.1} parent=47 // pred_region
          %s922 = smul.u32 2, %s31
          %s924 = ssub.s32 256, 256
          %925 = vsyncadd %s915, %s924
          %s926 = smul.addr %s30, 2
          %s927 = sadd.s32 %s922, %s926
          %s928 = smul.addr %s927, 128
          %s929 = scalar_lea.hbm %s7, %s928
          %s930 = sshll.u32 %s918, 4
          %s931 = int_to_ptr.vmem [resolvable:$true] %s930
          %936 = dma.vmem_to_hbm [thread:$0]  %s931, 256, %s929, %s915, 128, 128, 8
        $region76: #{tpu_custom_call.1} parent=47 // pred_fallthru
          _
      $region48: #{tpu_custom_call.1} parent=5 // pred_fallthru
        _
      %p937 = scmp.le.s32.totalorder 2, %s21
      // Predicated region
      $region77: #{tpu_custom_call.1} parent=5 // pred_check
        %p938 = pneg %p937
      $region78: #{tpu_custom_call.1} parent=5 // pred_check_branch
        %940 = sbr.rel (%p938) target = $region80
      $region79: #{tpu_custom_call.1} parent=5 // pred_region
        %s941 = ssub.s32 %s21, 2
        // Predicated region
        $region81: #{tpu_custom_call.1} parent=79 // pred_check
          %p942 = pneg %p218
        $region82: #{tpu_custom_call.1} parent=79 // pred_check_branch
          %944 = sbr.rel (%p942) target = $region84
        $region83: #{tpu_custom_call.1} parent=79 // pred_region
          %s945 = sand.u32 %s203, 1
          %s946 = scalar_lea.sflag [#allocation6], %s945
          %s947 = sand.u32 %s203, 1
          %s948 = smul.addr %s947, 16
          %s949 = scalar_lea.vmem [#allocation12], %s948
          %950 = dma.done %s946, 256
        $region84: #{tpu_custom_call.1} parent=79 // pred_fallthru
          _
      $region80: #{tpu_custom_call.1} parent=5 // pred_fallthru
        _
    $region6: #{tpu_custom_call.1} parent=1 // loop_footer
      %s25 = sadd.s32 1, %s21
    $region7: #{tpu_custom_call.1} parent=1 // loop_footer_branch
      %20 = sbr.rel target = $region3
    $region8: #{tpu_custom_call.1} parent=1 // loop_exit
      _
    %951 = vsyncpa [#allocation5], 1
    %s952 = scalar_lea.sflag [#allocation5], 1
    %953 = vsyncpa %s952, 1
    %954 = vsyncpa [#allocation8], 1
    %955 = vsyncpa [#allocation11], 1
    %956 = vsyncpa [#allocation6], 1
    %s957 = scalar_lea.sflag [#allocation6], 1
    %958 = vsyncpa %s957, 1

</llo_original>
